<compile_context>
chip_gen: v7x
topology: tpu7x:2x2x1
jax: 0.10.0
libtpu: 0.0.40
codegen_flags: <defaults>
</compile_context>

<pallas_src>
import functools

import jax
import jax.numpy as jnp
from jax.experimental import pallas as pl
from jax.experimental.pallas import tpu as pltpu

D_IN, D_IN_PAD = 784, 896      # 896 = 7 * 128 (lane-dense K for layer 1)
D_H1, D_H2 = 256, 128
D_OUT, D_OUT_PAD = 10, 128     # pad logits to a full 128-lane output block


def _round_up(n, m):
    return ((n + m - 1) // m) * m


def mlp_kernel(x_ref, w1_ref, b1_ref, w2_ref, b2_ref, w3_ref, b3_ref, o_ref):
    # Layer 1: Linear(784->256) + ReLU  (K zero-padded to 896; pad contributes 0).
    h1 = jnp.dot(x_ref[...], w1_ref[...], preferred_element_type=jnp.float32)
    h1 = jnp.maximum(h1 + b1_ref[...], 0.0)
    # Layer 2: Linear(256->128) + ReLU  (cast activations back to bf16 for the MXU).
    h2 = jnp.dot(h1.astype(w2_ref.dtype), w2_ref[...],
                 preferred_element_type=jnp.float32)
    h2 = jnp.maximum(h2 + b2_ref[...], 0.0)
    # Layer 3: Linear(128->10), output columns zero-padded to 128 lanes.
    o_ref[...] = (
        jnp.dot(h2.astype(w3_ref.dtype), w3_ref[...],
                preferred_element_type=jnp.float32)
        + b3_ref[...]
    )


def pack_params(params, compute_dtype=jnp.bfloat16):
    """Pad + cast canonical f32 params for the kernel.

    Canonical params: weights [in, out] f32, biases [1, out] f32.
    Returns: (w1[896,256] bf16, b1[1,256] f32, w2[256,128] bf16, b2[1,128] f32,
              w3[128,128] bf16, b3[1,128] f32), zero-padded where widened.
    """
    w1, b1, w2, b2, w3, b3 = params
    w1p = jnp.zeros((D_IN_PAD, D_H1), compute_dtype).at[:D_IN, :].set(
        w1.astype(compute_dtype))
    w3p = jnp.zeros((D_H2, D_OUT_PAD), compute_dtype).at[:, :D_OUT].set(
        w3.astype(compute_dtype))
    b3p = jnp.zeros((1, D_OUT_PAD), jnp.float32).at[:, :D_OUT].set(
        b3.astype(jnp.float32))
    return (
        w1p, b1.astype(jnp.float32),
        w2.astype(compute_dtype), b2.astype(jnp.float32),
        w3p, b3p,
    )


@functools.partial(jax.jit, static_argnames=("tile_b",))
def mnist_model_forward(x, packed_params, tile_b=512):
    """x: [B, 784] -> [B, 10] f32 logits."""
    w1, b1, w2, b2, w3, b3 = packed_params
    B = x.shape[0]
    compute_dtype = w1.dtype

    # Tile the batch: at least 8 rows (sublane), up to tile_b, batch padded to a multiple.
    tb = min(tile_b, _round_up(B, 8))
    Bp = _round_up(B, tb)
    grid = (Bp // tb,)

    # Zero-pad batch to Bp and contraction dim to 896; cast to bf16 for the MXU.
    xp = jnp.zeros((Bp, D_IN_PAD), compute_dtype)
    xp = xp.at[:B, :D_IN].set(x.astype(compute_dtype))

    flops = 2 * Bp * (D_IN_PAD * D_H1 + D_H1 * D_H2 + D_H2 * D_OUT_PAD)
    bytes_accessed = (
        Bp * D_IN_PAD * xp.dtype.itemsize
        + Bp * D_OUT_PAD * 4
        + sum(int(p.size) * p.dtype.itemsize for p in packed_params)
    )

    out = pl.pallas_call(
        mlp_kernel,
        out_shape=jax.ShapeDtypeStruct((Bp, D_OUT_PAD), jnp.float32),
        grid=grid,
        in_specs=[
            pl.BlockSpec((tb, D_IN_PAD), lambda i: (i, 0)),      # x tile (streamed)
            pl.BlockSpec((D_IN_PAD, D_H1), lambda i: (0, 0)),    # w1 (VMEM-resident)
            pl.BlockSpec((1, D_H1), lambda i: (0, 0)),           # b1
            pl.BlockSpec((D_H1, D_H2), lambda i: (0, 0)),        # w2
            pl.BlockSpec((1, D_H2), lambda i: (0, 0)),           # b2
            pl.BlockSpec((D_H2, D_OUT_PAD), lambda i: (0, 0)),   # w3 (out padded)
            pl.BlockSpec((1, D_OUT_PAD), lambda i: (0, 0)),      # b3
        ],
        out_specs=pl.BlockSpec((tb, D_OUT_PAD), lambda i: (i, 0)),
        compiler_params=pltpu.CompilerParams(
            dimension_semantics=("parallel",),   # v7x: shard batch tiles across 2 TCs
        ),
        cost_estimate=pl.CostEstimate(
            flops=flops, transcendentals=0, bytes_accessed=bytes_accessed
        ),
    )(xp, w1, b1, w2, b2, w3, b3)

    return out[:B, :D_OUT]


def init_params(key):
    """PyTorch nn.Linear-style init: U(-1/sqrt(in), 1/sqrt(in)).

    Weights [in, out] f32, biases [1, out] f32 (canonical, unpadded).
    """
    dims = [(D_IN, D_H1), (D_H1, D_H2), (D_H2, D_OUT)]
    params = []
    for d_in, d_out in dims:
        key, kw, kb = jax.random.split(key, 3)
        bound = 1.0 / jnp.sqrt(jnp.float32(d_in))
        w = jax.random.uniform(kw, (d_in, d_out), jnp.float32, -bound, bound)
        b = jax.random.uniform(kb, (1, d_out), jnp.float32, -bound, bound)
        params += [w, b]
    return tuple(params)


def reference_forward(x, params, compute_dtype=jnp.bfloat16):
    """Pure-JAX reference mirroring the kernel's precision (bf16 matmuls, f32 accum)."""
    w1, b1, w2, b2, w3, b3 = params
    h1 = jnp.maximum(
        jnp.dot(x.astype(compute_dtype), w1.astype(compute_dtype),
                preferred_element_type=jnp.float32) + b1, 0.0)
    h2 = jnp.maximum(
        jnp.dot(h1.astype(compute_dtype), w2.astype(compute_dtype),
                preferred_element_type=jnp.float32) + b2, 0.0)
    return jnp.dot(h2.astype(compute_dtype), w3.astype(compute_dtype),
                   preferred_element_type=jnp.float32) + b3


if __name__ == "__main__":
    key = jax.random.PRNGKey(0)
    key, kx = jax.random.split(key)
    B = 8
    x = jax.random.normal(kx, (B, D_IN), jnp.float32)

    params = init_params(key)
    packed = pack_params(params)

    out = mnist_model_forward(x, packed, tile_b=512)
    out = jax.block_until_ready(out)

    ref = reference_forward(x, params)
    assert out.shape == (B, D_OUT), out.shape
    assert jnp.allclose(out, ref, atol=1e-3, rtol=1e-3), "mismatch vs reference"
    print("KERNEL_OK")
</pallas_src>

<mosaic_0001>
module attributes {stable_mosaic.version = 11 : i64} {
  func.func @mlp_kernel(%arg0: i32, %arg1: memref<8x896xbf16, #tpu.memory_space<vmem>>, %arg2: memref<896x256xbf16, #tpu.memory_space<vmem>>, %arg3: memref<1x256xf32, #tpu.memory_space<vmem>>, %arg4: memref<256x128xbf16, #tpu.memory_space<vmem>>, %arg5: memref<1x128xf32, #tpu.memory_space<vmem>>, %arg6: memref<128x128xbf16, #tpu.memory_space<vmem>>, %arg7: memref<1x128xf32, #tpu.memory_space<vmem>>, %arg8: memref<8x128xf32, #tpu.memory_space<vmem>>) attributes {dimension_semantics = [#tpu.dimension_semantics<parallel>], iteration_bounds = array<i64: 1>, scalar_prefetch = 0 : i64, scratch_operands = 0 : i64, tpu.core_type = #tpu.core_type<tc>, window_params = [{transform_indices = @transform_0, window_bounds = array<i64: 8, 896>}, {pipeline_mode = #tpu.pipeline_mode<synchronous>, transform_indices = @transform_1, window_bounds = array<i64: 896, 256>}, {pipeline_mode = #tpu.pipeline_mode<synchronous>, transform_indices = @transform_2, window_bounds = array<i64: 1, 256>}, {pipeline_mode = #tpu.pipeline_mode<synchronous>, transform_indices = @transform_3, window_bounds = array<i64: 256, 128>}, {pipeline_mode = #tpu.pipeline_mode<synchronous>, transform_indices = @transform_4, window_bounds = array<i64: 1, 128>}, {pipeline_mode = #tpu.pipeline_mode<synchronous>, transform_indices = @transform_5, window_bounds = array<i64: 128, 128>}, {pipeline_mode = #tpu.pipeline_mode<synchronous>, transform_indices = @transform_6, window_bounds = array<i64: 1, 128>}, {transform_indices = @transform_7, window_bounds = array<i64: 8, 128>}]} {
    %c0 = arith.constant 0 : index
    %c0_0 = arith.constant 0 : index
    %0 = vector.load %arg1[%c0, %c0_0] : memref<8x896xbf16, #tpu.memory_space<vmem>>, vector<8x896xbf16>
    %c0_1 = arith.constant 0 : index
    %c0_2 = arith.constant 0 : index
    %1 = vector.load %arg2[%c0_1, %c0_2] : memref<896x256xbf16, #tpu.memory_space<vmem>>, vector<896x256xbf16>
    %cst = arith.constant dense<0.000000e+00> : vector<8x256xf32>
    %2 = tpu.matmul %0, %1, %cst {dimension_numbers = #tpu.dot_dimension_numbers<[1], [0], [0], [1], [0, 0, 1, 1], [], []>} : vector<8x896xbf16>, vector<896x256xbf16>, vector<8x256xf32> -> vector<8x256xf32>
    %c0_3 = arith.constant 0 : index
    %c0_4 = arith.constant 0 : index
    %3 = vector.load %arg3[%c0_3, %c0_4] : memref<1x256xf32, #tpu.memory_space<vmem>>, vector<1x256xf32>
    %4 = vector.broadcast %3 : vector<1x256xf32> to vector<8x256xf32>
    %5 = arith.addf %2, %4 : vector<8x256xf32>
    %cst_5 = arith.constant 0.000000e+00 : f32
    %6 = vector.broadcast %cst_5 : f32 to vector<8x256xf32>
    %7 = arith.maximumf %5, %6 : vector<8x256xf32>
    %8 = arith.truncf %7 : vector<8x256xf32> to vector<8x256xbf16>
    %c0_6 = arith.constant 0 : index
    %c0_7 = arith.constant 0 : index
    %9 = vector.load %arg4[%c0_6, %c0_7] : memref<256x128xbf16, #tpu.memory_space<vmem>>, vector<256x128xbf16>
    %cst_8 = arith.constant dense<0.000000e+00> : vector<8x128xf32>
    %10 = tpu.matmul %8, %9, %cst_8 {dimension_numbers = #tpu.dot_dimension_numbers<[1], [0], [0], [1], [0, 0, 1, 1], [], []>} : vector<8x256xbf16>, vector<256x128xbf16>, vector<8x128xf32> -> vector<8x128xf32>
    %c0_9 = arith.constant 0 : index
    %c0_10 = arith.constant 0 : index
    %11 = vector.load %arg5[%c0_9, %c0_10] : memref<1x128xf32, #tpu.memory_space<vmem>>, vector<1x128xf32>
    %12 = vector.broadcast %11 : vector<1x128xf32> to vector<8x128xf32>
    %13 = arith.addf %10, %12 : vector<8x128xf32>
    %cst_11 = arith.constant 0.000000e+00 : f32
    %14 = vector.broadcast %cst_11 : f32 to vector<8x128xf32>
    %15 = arith.maximumf %13, %14 : vector<8x128xf32>
    %16 = arith.truncf %15 : vector<8x128xf32> to vector<8x128xbf16>
    %c0_12 = arith.constant 0 : index
    %c0_13 = arith.constant 0 : index
    %17 = vector.load %arg6[%c0_12, %c0_13] : memref<128x128xbf16, #tpu.memory_space<vmem>>, vector<128x128xbf16>
    %cst_14 = arith.constant dense<0.000000e+00> : vector<8x128xf32>
    %18 = tpu.matmul %16, %17, %cst_14 {dimension_numbers = #tpu.dot_dimension_numbers<[1], [0], [0], [1], [0, 0, 1, 1], [], []>} : vector<8x128xbf16>, vector<128x128xbf16>, vector<8x128xf32> -> vector<8x128xf32>
    %c0_15 = arith.constant 0 : index
    %c0_16 = arith.constant 0 : index
    %19 = vector.load %arg7[%c0_15, %c0_16] : memref<1x128xf32, #tpu.memory_space<vmem>>, vector<1x128xf32>
    %20 = vector.broadcast %19 : vector<1x128xf32> to vector<8x128xf32>
    %21 = arith.addf %18, %20 : vector<8x128xf32>
    %c0_17 = arith.constant 0 : index
    %c0_18 = arith.constant 0 : index
    %22 = vector.load %arg8[%c0_17, %c0_18] : memref<8x128xf32, #tpu.memory_space<vmem>>, vector<8x128xf32>
    tpu.vector_store %arg8[%c0_17, %c0_18], %21 {strides = array<i32>} : memref<8x128xf32, #tpu.memory_space<vmem>>, vector<8x128xf32>,
    return
  }
  func.func @transform_0(%arg0: i32) -> (i32, i32) {
    %c0_i32 = arith.constant 0 : i32
    %c0_i32_0 = arith.constant 0 : i32
    return %arg0, %c0_i32 : i32, i32
  }
  func.func @transform_1(%arg0: i32) -> (i32, i32) {
    %c0_i32 = arith.constant 0 : i32
    %c0_i32_0 = arith.constant 0 : i32
    %c0_i32_1 = arith.constant 0 : i32
    return %c0_i32, %c0_i32_0 : i32, i32
  }
  func.func @transform_2(%arg0: i32) -> (i32, i32) {
    %c0_i32 = arith.constant 0 : i32
    %c0_i32_0 = arith.constant 0 : i32
    %c0_i32_1 = arith.constant 0 : i32
    return %c0_i32, %c0_i32_0 : i32, i32
  }
  func.func @transform_3(%arg0: i32) -> (i32, i32) {
    %c0_i32 = arith.constant 0 : i32
    %c0_i32_0 = arith.constant 0 : i32
    %c0_i32_1 = arith.constant 0 : i32
    return %c0_i32, %c0_i32_0 : i32, i32
  }
  func.func @transform_4(%arg0: i32) -> (i32, i32) {
    %c0_i32 = arith.constant 0 : i32
    %c0_i32_0 = arith.constant 0 : i32
    %c0_i32_1 = arith.constant 0 : i32
    return %c0_i32, %c0_i32_0 : i32, i32
  }
  func.func @transform_5(%arg0: i32) -> (i32, i32) {
    %c0_i32 = arith.constant 0 : i32
    %c0_i32_0 = arith.constant 0 : i32
    %c0_i32_1 = arith.constant 0 : i32
    return %c0_i32, %c0_i32_0 : i32, i32
  }
  func.func @transform_6(%arg0: i32) -> (i32, i32) {
    %c0_i32 = arith.constant 0 : i32
    %c0_i32_0 = arith.constant 0 : i32
    %c0_i32_1 = arith.constant 0 : i32
    return %c0_i32, %c0_i32_0 : i32, i32
  }
  func.func @transform_7(%arg0: i32) -> (i32, i32) {
    %c0_i32 = arith.constant 0 : i32
    %c0_i32_0 = arith.constant 0 : i32
    return %arg0, %c0_i32 : i32, i32
  }
}

</mosaic_0001>

<llo_original>
// kernel: mnist_model_forward.1
$region0: #{mnist_model_forward.1}
  #allocation0 [shape = 'u32[]', space=smem, size = 0x4, offset = 0x4, fixed_abs, tag = 'smem constant byte address 0x4 - core index']
  #allocation1 [shape = 'u32[144,128]{1,0:T(1,128)}', space=vmem, size = 0x12000, scoped, tag = 'internal scratch']
  %s0 = inlined_call_operand.vmem [shape: bf16[8,896], index: 0, kind: input, shape index: {}]
  %s1 = inlined_call_operand.hbm [shape: bf16[896,256], index: 1, kind: input, shape index: {}]
  %s2 = inlined_call_operand.vmem [shape: f32[1,256], index: 2, kind: input, shape index: {}]
  %s3 = inlined_call_operand.vmem [shape: bf16[256,128], index: 3, kind: input, shape index: {}]
  %s4 = inlined_call_operand.vmem [shape: f32[1,128], index: 4, kind: input, shape index: {}]
  %s5 = inlined_call_operand.hbm [shape: bf16[128,128], index: 5, kind: input, shape index: {}]
  %s6 = inlined_call_operand.vmem [shape: f32[1,128], index: 6, kind: input, shape index: {}]
  %s7 = inlined_call_operand.hbm [shape: f32[8,128], index: 7, kind: output, shape index: {}]
  %s8 = sld [smem:[#allocation0]]
  $region46: #{mnist_model_forward.1} parent=0
    _
  %s10 = ssub.s32 1, %s8
  %s11 = scalar_select 0, %s10, %s8
  $region1: #{mnist_model_forward.1} parent=0
    #allocation2 [shape = 'u8[458752]{0}', space=vmem, size = 0x70000, scoped, tag = 'input window, operand 1, single buffered']
    #allocation3 [shape = 's32[1]{0}', space=sflag, size = 0x4, scoped, tag = 'scoped memory for mnist_model_forward.1']
    #allocation4 [shape = 's32[1]{0}', space=sflag, size = 0x4, scoped, tag = 'scoped memory for mnist_model_forward.1']
    #allocation5 [shape = 'u8[32768]{0}', space=vmem, size = 0x8000, scoped, tag = 'input window, operand 5, single buffered']
    #allocation6 [shape = 's32[1]{0}', space=sflag, size = 0x4, scoped, tag = 'scoped memory for mnist_model_forward.1']
    #allocation7 [shape = 'u8[4096]{0}', space=vmem, size = 0x1000, scoped, tag = 'output window, operand 0, single buffered']
    %12 = vsyncpa [#allocation3], 0
    %13 = vsyncpa [#allocation6], 0
    %14 = vsyncpa [#allocation4], 0
    // Predicated region
    $region2: #{mnist_model_forward.1} parent=1 // pred_check
      _
    $region3: #{mnist_model_forward.1} parent=1 // pred_check_branch
      %16 = sbr.rel (0) target = $region5
    $region4: #{mnist_model_forward.1} parent=1 // pred_region
      _
    $region5: #{mnist_model_forward.1} parent=1 // pred_fallthru
      _
    // Predicated region
    $region6: #{mnist_model_forward.1} parent=1 // pred_check
      _
    $region7: #{mnist_model_forward.1} parent=1 // pred_check_branch
      %18 = sbr.rel (0) target = $region9
    $region8: #{mnist_model_forward.1} parent=1 // pred_region
      %s20 = ssub.s32 14336, 14336
      %21 = vsyncadd [#allocation3], %s20
      %s22 = sshll.u32 [#allocation2], 4
      %s23 = int_to_ptr.vmem [resolvable:$true] %s22
      %28 = dma.hbm_to_vmem [thread:$0]  %s1, 14336, %s23, [#allocation3], 128, 128, 8
    $region9: #{mnist_model_forward.1} parent=1 // pred_fallthru
      _
    // Predicated region
    $region10: #{mnist_model_forward.1} parent=1 // pred_check
      _
    $region11: #{mnist_model_forward.1} parent=1 // pred_check_branch
      %30 = sbr.rel (0) target = $region13
    $region12: #{mnist_model_forward.1} parent=1 // pred_region
      _
    $region13: #{mnist_model_forward.1} parent=1 // pred_fallthru
      _
    // Predicated region
    $region14: #{mnist_model_forward.1} parent=1 // pred_check
      _
    $region15: #{mnist_model_forward.1} parent=1 // pred_check_branch
      %32 = sbr.rel (0) target = $region17
    $region16: #{mnist_model_forward.1} parent=1 // pred_region
      _
    $region17: #{mnist_model_forward.1} parent=1 // pred_fallthru
      _
    // Predicated region
    $region18: #{mnist_model_forward.1} parent=1 // pred_check
      _
    $region19: #{mnist_model_forward.1} parent=1 // pred_check_branch
      %34 = sbr.rel (0) target = $region21
    $region20: #{mnist_model_forward.1} parent=1 // pred_region
      _
    $region21: #{mnist_model_forward.1} parent=1 // pred_fallthru
      _
    // Predicated region
    $region22: #{mnist_model_forward.1} parent=1 // pred_check
      _
    $region23: #{mnist_model_forward.1} parent=1 // pred_check_branch
      %36 = sbr.rel (0) target = $region25
    $region24: #{mnist_model_forward.1} parent=1 // pred_region
      %s38 = ssub.s32 1024, 1024
      %39 = vsyncadd [#allocation6], %s38
      %s40 = sshll.u32 [#allocation5], 4
      %s41 = int_to_ptr.vmem [resolvable:$true] %s40
      %46 = dma.hbm_to_vmem [thread:$0]  %s5, 1024, %s41, [#allocation6], 64, 64, 4
    $region25: #{mnist_model_forward.1} parent=1 // pred_fallthru
      _
    // Predicated region
    $region26: #{mnist_model_forward.1} parent=1 // pred_check
      _
    $region27: #{mnist_model_forward.1} parent=1 // pred_check_branch
      %48 = sbr.rel (0) target = $region29
    $region28: #{mnist_model_forward.1} parent=1 // pred_region
      _
    $region29: #{mnist_model_forward.1} parent=1 // pred_fallthru
      _
    // Predicated region
    $region30: #{mnist_model_forward.1} parent=1 // pred_check
      _
    $region31: #{mnist_model_forward.1} parent=1 // pred_check_branch
      %50 = sbr.rel (0) target = $region33
    $region32: #{mnist_model_forward.1} parent=1 // pred_region
      %51 = dma.done [#allocation3], 14336
    $region33: #{mnist_model_forward.1} parent=1 // pred_fallthru
      _
    // Predicated region
    $region34: #{mnist_model_forward.1} parent=1 // pred_check
      _
    $region35: #{mnist_model_forward.1} parent=1 // pred_check_branch
      %53 = sbr.rel (0) target = $region37
    $region36: #{mnist_model_forward.1} parent=1 // pred_region
      %54 = dma.done [#allocation6], 1024
    $region37: #{mnist_model_forward.1} parent=1 // pred_fallthru
      _
    %v56 = vld [vmem:[%s0] sm:$0xff]
    %v57 = vld [vmem:[%s0 + $0x8] sm:$0xff]
    %v58 = vld [vmem:[%s0 + $0x10] sm:$0xff]
    %v59 = vld [vmem:[%s0 + $0x18] sm:$0xf]
    %v60 = vld [vmem:[#allocation2] sm:$0xff]
    %v61 = vld [vmem:[#allocation2 + $0x8] sm:$0xff]
    %v62 = vld [vmem:[#allocation2 + $0x10] sm:$0xff]
    %v63 = vld [vmem:[#allocation2 + $0x18] sm:$0xff]
    %v64 = vld [vmem:[#allocation2 + $0x20] sm:$0xff]
    %v65 = vld [vmem:[#allocation2 + $0x28] sm:$0xff]
    %v66 = vld [vmem:[#allocation2 + $0x30] sm:$0xff]
    %v67 = vld [vmem:[#allocation2 + $0x38] sm:$0xff]
    %v68 = vld [vmem:[#allocation2 + $0x40] sm:$0xff]
    %v69 = vld [vmem:[#allocation2 + $0x48] sm:$0xff]
    %v70 = vld [vmem:[#allocation2 + $0x50] sm:$0xff]
    %v71 = vld [vmem:[#allocation2 + $0x58] sm:$0xff]
    %v72 = vld [vmem:[#allocation2 + $0x60] sm:$0xff]
    %v73 = vld [vmem:[#allocation2 + $0x68] sm:$0xff]
    %v74 = vld [vmem:[#allocation2 + $0x70] sm:$0xff]
    %v75 = vld [vmem:[#allocation2 + $0x78] sm:$0xff]
    %v76 = vld [vmem:[#allocation2 + $0x80] sm:$0xff]
    %v77 = vld [vmem:[#allocation2 + $0x88] sm:$0xff]
    %v78 = vld [vmem:[#allocation2 + $0x90] sm:$0xff]
    %v79 = vld [vmem:[#allocation2 + $0x98] sm:$0xff]
    %v80 = vld [vmem:[#allocation2 + $0xa0] sm:$0xff]
    %v81 = vld [vmem:[#allocation2 + $0xa8] sm:$0xff]
    %v82 = vld [vmem:[#allocation2 + $0xb0] sm:$0xff]
    %v83 = vld [vmem:[#allocation2 + $0xb8] sm:$0xff]
    %v84 = vld [vmem:[#allocation2 + $0xc0] sm:$0xff]
    %v85 = vld [vmem:[#allocation2 + $0xc8] sm:$0xff]
    %v86 = vld [vmem:[#allocation2 + $0xd0] sm:$0xff]
    %v87 = vld [vmem:[#allocation2 + $0xd8] sm:$0xff]
    %v88 = vld [vmem:[#allocation2 + $0xe0] sm:$0xff]
    %v89 = vld [vmem:[#allocation2 + $0xe8] sm:$0xff]
    %v90 = vld [vmem:[#allocation2 + $0xf0] sm:$0xff]
    %v91 = vld [vmem:[#allocation2 + $0xf8] sm:$0xff]
    %v92 = vld [vmem:[#allocation2 + $0x100] sm:$0xff]
    %v93 = vld [vmem:[#allocation2 + $0x108] sm:$0xff]
    %v94 = vld [vmem:[#allocation2 + $0x110] sm:$0xff]
    %v95 = vld [vmem:[#allocation2 + $0x118] sm:$0xff]
    %v96 = vld [vmem:[#allocation2 + $0x120] sm:$0xff]
    %v97 = vld [vmem:[#allocation2 + $0x128] sm:$0xff]
    %v98 = vld [vmem:[#allocation2 + $0x130] sm:$0xff]
    %v99 = vld [vmem:[#allocation2 + $0x138] sm:$0xff]
    %v100 = vld [vmem:[#allocation2 + $0x140] sm:$0xff]
    %v101 = vld [vmem:[#allocation2 + $0x148] sm:$0xff]
    %v102 = vld [vmem:[#allocation2 + $0x150] sm:$0xff]
    %v103 = vld [vmem:[#allocation2 + $0x158] sm:$0xff]
    %v104 = vld [vmem:[#allocation2 + $0x160] sm:$0xff]
    %v105 = vld [vmem:[#allocation2 + $0x168] sm:$0xff]
    %v106 = vld [vmem:[#allocation2 + $0x170] sm:$0xff]
    %v107 = vld [vmem:[#allocation2 + $0x178] sm:$0xff]
    %v108 = vld [vmem:[#allocation2 + $0x180] sm:$0xff]
    %v109 = vld [vmem:[#allocation2 + $0x188] sm:$0xff]
    %v110 = vld [vmem:[#allocation2 + $0x190] sm:$0xff]
    %v111 = vld [vmem:[#allocation2 + $0x198] sm:$0xff]
    %v112 = vld [vmem:[#allocation2 + $0x1a0] sm:$0xff]
    %v113 = vld [vmem:[#allocation2 + $0x1a8] sm:$0xff]
    %v114 = vld [vmem:[#allocation2 + $0x1b0] sm:$0xff]
    %v115 = vld [vmem:[#allocation2 + $0x1b8] sm:$0xff]
    %v116 = vld [vmem:[#allocation2 + $0x1c0] sm:$0xff]
    %v117 = vld [vmem:[#allocation2 + $0x1c8] sm:$0xff]
    %v118 = vld [vmem:[#allocation2 + $0x1d0] sm:$0xff]
    %v119 = vld [vmem:[#allocation2 + $0x1d8] sm:$0xff]
    %v120 = vld [vmem:[#allocation2 + $0x1e0] sm:$0xff]
    %v121 = vld [vmem:[#allocation2 + $0x1e8] sm:$0xff]
    %v122 = vld [vmem:[#allocation2 + $0x1f0] sm:$0xff]
    %v123 = vld [vmem:[#allocation2 + $0x1f8] sm:$0xff]
    %v124 = vld [vmem:[#allocation2 + $0x200] sm:$0xff]
    %v125 = vld [vmem:[#allocation2 + $0x208] sm:$0xff]
    %v126 = vld [vmem:[#allocation2 + $0x210] sm:$0xff]
    %v127 = vld [vmem:[#allocation2 + $0x218] sm:$0xff]
    %v128 = vld [vmem:[#allocation2 + $0x220] sm:$0xff]
    %v129 = vld [vmem:[#allocation2 + $0x228] sm:$0xff]
    %v130 = vld [vmem:[#allocation2 + $0x230] sm:$0xff]
    %v131 = vld [vmem:[#allocation2 + $0x238] sm:$0xff]
    %v132 = vld [vmem:[#allocation2 + $0x240] sm:$0xff]
    %v133 = vld [vmem:[#allocation2 + $0x248] sm:$0xff]
    %v134 = vld [vmem:[#allocation2 + $0x250] sm:$0xff]
    %v135 = vld [vmem:[#allocation2 + $0x258] sm:$0xff]
    %v136 = vld [vmem:[#allocation2 + $0x260] sm:$0xff]
    %v137 = vld [vmem:[#allocation2 + $0x268] sm:$0xff]
    %v138 = vld [vmem:[#allocation2 + $0x270] sm:$0xff]
    %v139 = vld [vmem:[#allocation2 + $0x278] sm:$0xff]
    %v140 = vld [vmem:[#allocation2 + $0x280] sm:$0xff]
    %v141 = vld [vmem:[#allocation2 + $0x288] sm:$0xff]
    %v142 = vld [vmem:[#allocation2 + $0x290] sm:$0xff]
    %v143 = vld [vmem:[#allocation2 + $0x298] sm:$0xff]
    %v144 = vld [vmem:[#allocation2 + $0x2a0] sm:$0xff]
    %v145 = vld [vmem:[#allocation2 + $0x2a8] sm:$0xff]
    %v146 = vld [vmem:[#allocation2 + $0x2b0] sm:$0xff]
    %v147 = vld [vmem:[#allocation2 + $0x2b8] sm:$0xff]
    %v148 = vld [vmem:[#allocation2 + $0x2c0] sm:$0xff]
    %v149 = vld [vmem:[#allocation2 + $0x2c8] sm:$0xff]
    %v150 = vld [vmem:[#allocation2 + $0x2d0] sm:$0xff]
    %v151 = vld [vmem:[#allocation2 + $0x2d8] sm:$0xff]
    %v152 = vld [vmem:[#allocation2 + $0x2e0] sm:$0xff]
    %v153 = vld [vmem:[#allocation2 + $0x2e8] sm:$0xff]
    %v154 = vld [vmem:[#allocation2 + $0x2f0] sm:$0xff]
    %v155 = vld [vmem:[#allocation2 + $0x2f8] sm:$0xff]
    %v156 = vld [vmem:[#allocation2 + $0x300] sm:$0xff]
    %v157 = vld [vmem:[#allocation2 + $0x308] sm:$0xff]
    %v158 = vld [vmem:[#allocation2 + $0x310] sm:$0xff]
    %v159 = vld [vmem:[#allocation2 + $0x318] sm:$0xff]
    %v160 = vld [vmem:[#allocation2 + $0x320] sm:$0xff]
    %v161 = vld [vmem:[#allocation2 + $0x328] sm:$0xff]
    %v162 = vld [vmem:[#allocation2 + $0x330] sm:$0xff]
    %v163 = vld [vmem:[#allocation2 + $0x338] sm:$0xff]
    %v164 = vld [vmem:[#allocation2 + $0x340] sm:$0xff]
    %v165 = vld [vmem:[#allocation2 + $0x348] sm:$0xff]
    %v166 = vld [vmem:[#allocation2 + $0x350] sm:$0xff]
    %v167 = vld [vmem:[#allocation2 + $0x358] sm:$0xff]
    %v168 = vld [vmem:[#allocation2 + $0x360] sm:$0xff]
    %v169 = vld [vmem:[#allocation2 + $0x368] sm:$0xff]
    %v170 = vld [vmem:[#allocation2 + $0x370] sm:$0xff]
    %v171 = vld [vmem:[#allocation2 + $0x378] sm:$0xff]
    %v172 = vld [vmem:[%s2] sm:$0x3]
    %v174 = vlaneseq
    %v175 = vshrl.u32 %v174, 7
    %v176 = vsub.s32 0, %v175
    %v177 = vrot.slane %v172, %v176
    %v178 = vlaneseq
    %v179 = vshrl.u32 %v178, 7
    %v180 = vsub.s32 1, %v179
    %v181 = vrot.slane %v172, %v180
    %v188 = vunpack.c.l.b16 %v56
    %v189 = vunpack.c.h.b16 %v56
    %v190 = vunpack.c.l.b16 %v57
    %v191 = vunpack.c.h.b16 %v57
    %v192 = vunpack.c.l.b16 %v58
    %v193 = vunpack.c.h.b16 %v58
    %v194 = vunpack.c.l.b16 %v59
    %v195 = vpack.c.b16 %v188, %v188
    %v196 = vpack.c.b16 %v189, %v189
    %v197 = vpack.c.b16 %v190, %v190
    %v198 = vpack.c.b16 %v191, %v191
    %v199 = vpack.c.b16 %v192, %v192
    %v200 = vpack.c.b16 %v193, %v193
    %v201 = vpack.c.b16 %v194, %v194
    %v321 = vunpack.c.l.b16 %v60
    %v322 = vunpack.c.h.b16 %v60
    %v323 = vunpack.c.l.b16 %v61
    %v324 = vunpack.c.h.b16 %v61
    %v325 = vunpack.c.l.b16 %v62
    %v326 = vunpack.c.h.b16 %v62
    %v327 = vunpack.c.l.b16 %v63
    %v328 = vunpack.c.h.b16 %v63
    %v329 = vunpack.c.l.b16 %v64
    %v330 = vunpack.c.h.b16 %v64
    %v331 = vunpack.c.l.b16 %v65
    %v332 = vunpack.c.h.b16 %v65
    %v333 = vunpack.c.l.b16 %v66
    %v334 = vunpack.c.h.b16 %v66
    %v335 = vunpack.c.l.b16 %v67
    %v336 = vunpack.c.h.b16 %v67
    %v337 = vunpack.c.l.b16 %v68
    %v338 = vunpack.c.h.b16 %v68
    %v339 = vunpack.c.l.b16 %v69
    %v340 = vunpack.c.h.b16 %v69
    %v341 = vunpack.c.l.b16 %v70
    %v342 = vunpack.c.h.b16 %v70
    %v343 = vunpack.c.l.b16 %v71
    %v344 = vunpack.c.h.b16 %v71
    %v345 = vunpack.c.l.b16 %v72
    %v346 = vunpack.c.h.b16 %v72
    %v347 = vunpack.c.l.b16 %v73
    %v348 = vunpack.c.h.b16 %v73
    %v349 = vunpack.c.l.b16 %v74
    %v350 = vunpack.c.h.b16 %v74
    %v351 = vunpack.c.l.b16 %v75
    %v352 = vunpack.c.h.b16 %v75
    %v353 = vunpack.c.l.b16 %v76
    %v354 = vunpack.c.h.b16 %v76
    %v355 = vunpack.c.l.b16 %v77
    %v356 = vunpack.c.h.b16 %v77
    %v357 = vunpack.c.l.b16 %v78
    %v358 = vunpack.c.h.b16 %v78
    %v359 = vunpack.c.l.b16 %v79
    %v360 = vunpack.c.h.b16 %v79
    %v361 = vunpack.c.l.b16 %v80
    %v362 = vunpack.c.h.b16 %v80
    %v363 = vunpack.c.l.b16 %v81
    %v364 = vunpack.c.h.b16 %v81
    %v365 = vunpack.c.l.b16 %v82
    %v366 = vunpack.c.h.b16 %v82
    %v367 = vunpack.c.l.b16 %v83
    %v368 = vunpack.c.h.b16 %v83
    %v369 = vunpack.c.l.b16 %v84
    %v370 = vunpack.c.h.b16 %v84
    %v371 = vunpack.c.l.b16 %v85
    %v372 = vunpack.c.h.b16 %v85
    %v373 = vunpack.c.l.b16 %v86
    %v374 = vunpack.c.h.b16 %v86
    %v375 = vunpack.c.l.b16 %v87
    %v376 = vunpack.c.h.b16 %v87
    %v377 = vunpack.c.l.b16 %v88
    %v378 = vunpack.c.h.b16 %v88
    %v379 = vunpack.c.l.b16 %v89
    %v380 = vunpack.c.h.b16 %v89
    %v381 = vunpack.c.l.b16 %v90
    %v382 = vunpack.c.h.b16 %v90
    %v383 = vunpack.c.l.b16 %v91
    %v384 = vunpack.c.h.b16 %v91
    %v385 = vunpack.c.l.b16 %v92
    %v386 = vunpack.c.h.b16 %v92
    %v387 = vunpack.c.l.b16 %v93
    %v388 = vunpack.c.h.b16 %v93
    %v389 = vunpack.c.l.b16 %v94
    %v390 = vunpack.c.h.b16 %v94
    %v391 = vunpack.c.l.b16 %v95
    %v392 = vunpack.c.h.b16 %v95
    %v393 = vunpack.c.l.b16 %v96
    %v394 = vunpack.c.h.b16 %v96
    %v395 = vunpack.c.l.b16 %v97
    %v396 = vunpack.c.h.b16 %v97
    %v397 = vunpack.c.l.b16 %v98
    %v398 = vunpack.c.h.b16 %v98
    %v399 = vunpack.c.l.b16 %v99
    %v400 = vunpack.c.h.b16 %v99
    %v401 = vunpack.c.l.b16 %v100
    %v402 = vunpack.c.h.b16 %v100
    %v403 = vunpack.c.l.b16 %v101
    %v404 = vunpack.c.h.b16 %v101
    %v405 = vunpack.c.l.b16 %v102
    %v406 = vunpack.c.h.b16 %v102
    %v407 = vunpack.c.l.b16 %v103
    %v408 = vunpack.c.h.b16 %v103
    %v409 = vunpack.c.l.b16 %v104
    %v410 = vunpack.c.h.b16 %v104
    %v411 = vunpack.c.l.b16 %v105
    %v412 = vunpack.c.h.b16 %v105
    %v413 = vunpack.c.l.b16 %v106
    %v414 = vunpack.c.h.b16 %v106
    %v415 = vunpack.c.l.b16 %v107
    %v416 = vunpack.c.h.b16 %v107
    %v417 = vunpack.c.l.b16 %v108
    %v418 = vunpack.c.h.b16 %v108
    %v419 = vunpack.c.l.b16 %v109
    %v420 = vunpack.c.h.b16 %v109
    %v421 = vunpack.c.l.b16 %v110
    %v422 = vunpack.c.h.b16 %v110
    %v423 = vunpack.c.l.b16 %v111
    %v424 = vunpack.c.h.b16 %v111
    %v425 = vunpack.c.l.b16 %v112
    %v426 = vunpack.c.h.b16 %v112
    %v427 = vunpack.c.l.b16 %v113
    %v428 = vunpack.c.h.b16 %v113
    %v429 = vunpack.c.l.b16 %v114
    %v430 = vunpack.c.h.b16 %v114
    %v431 = vunpack.c.l.b16 %v115
    %v432 = vunpack.c.h.b16 %v115
    %v433 = vunpack.c.l.b16 %v116
    %v434 = vunpack.c.h.b16 %v116
    %v435 = vunpack.c.l.b16 %v117
    %v436 = vunpack.c.h.b16 %v117
    %v437 = vunpack.c.l.b16 %v118
    %v438 = vunpack.c.h.b16 %v118
    %v439 = vunpack.c.l.b16 %v119
    %v440 = vunpack.c.h.b16 %v119
    %v441 = vunpack.c.l.b16 %v120
    %v442 = vunpack.c.h.b16 %v120
    %v443 = vunpack.c.l.b16 %v121
    %v444 = vunpack.c.h.b16 %v121
    %v445 = vunpack.c.l.b16 %v122
    %v446 = vunpack.c.h.b16 %v122
    %v447 = vunpack.c.l.b16 %v123
    %v448 = vunpack.c.h.b16 %v123
    %v449 = vunpack.c.l.b16 %v124
    %v450 = vunpack.c.h.b16 %v124
    %v451 = vunpack.c.l.b16 %v125
    %v452 = vunpack.c.h.b16 %v125
    %v453 = vunpack.c.l.b16 %v126
    %v454 = vunpack.c.h.b16 %v126
    %v455 = vunpack.c.l.b16 %v127
    %v456 = vunpack.c.h.b16 %v127
    %v457 = vunpack.c.l.b16 %v128
    %v458 = vunpack.c.h.b16 %v128
    %v459 = vunpack.c.l.b16 %v129
    %v460 = vunpack.c.h.b16 %v129
    %v461 = vunpack.c.l.b16 %v130
    %v462 = vunpack.c.h.b16 %v130
    %v463 = vunpack.c.l.b16 %v131
    %v464 = vunpack.c.h.b16 %v131
    %v465 = vunpack.c.l.b16 %v132
    %v466 = vunpack.c.h.b16 %v132
    %v467 = vunpack.c.l.b16 %v133
    %v468 = vunpack.c.h.b16 %v133
    %v469 = vunpack.c.l.b16 %v134
    %v470 = vunpack.c.h.b16 %v134
    %v471 = vunpack.c.l.b16 %v135
    %v472 = vunpack.c.h.b16 %v135
    %v473 = vunpack.c.l.b16 %v136
    %v474 = vunpack.c.h.b16 %v136
    %v475 = vunpack.c.l.b16 %v137
    %v476 = vunpack.c.h.b16 %v137
    %v477 = vunpack.c.l.b16 %v138
    %v478 = vunpack.c.h.b16 %v138
    %v479 = vunpack.c.l.b16 %v139
    %v480 = vunpack.c.h.b16 %v139
    %v481 = vunpack.c.l.b16 %v140
    %v482 = vunpack.c.h.b16 %v140
    %v483 = vunpack.c.l.b16 %v141
    %v484 = vunpack.c.h.b16 %v141
    %v485 = vunpack.c.l.b16 %v142
    %v486 = vunpack.c.h.b16 %v142
    %v487 = vunpack.c.l.b16 %v143
    %v488 = vunpack.c.h.b16 %v143
    %v489 = vunpack.c.l.b16 %v144
    %v490 = vunpack.c.h.b16 %v144
    %v491 = vunpack.c.l.b16 %v145
    %v492 = vunpack.c.h.b16 %v145
    %v493 = vunpack.c.l.b16 %v146
    %v494 = vunpack.c.h.b16 %v146
    %v495 = vunpack.c.l.b16 %v147
    %v496 = vunpack.c.h.b16 %v147
    %v497 = vunpack.c.l.b16 %v148
    %v498 = vunpack.c.h.b16 %v148
    %v499 = vunpack.c.l.b16 %v149
    %v500 = vunpack.c.h.b16 %v149
    %v501 = vunpack.c.l.b16 %v150
    %v502 = vunpack.c.h.b16 %v150
    %v503 = vunpack.c.l.b16 %v151
    %v504 = vunpack.c.h.b16 %v151
    %v505 = vunpack.c.l.b16 %v152
    %v506 = vunpack.c.h.b16 %v152
    %v507 = vunpack.c.l.b16 %v153
    %v508 = vunpack.c.h.b16 %v153
    %v509 = vunpack.c.l.b16 %v154
    %v510 = vunpack.c.h.b16 %v154
    %v511 = vunpack.c.l.b16 %v155
    %v512 = vunpack.c.h.b16 %v155
    %v513 = vunpack.c.l.b16 %v156
    %v514 = vunpack.c.h.b16 %v156
    %v515 = vunpack.c.l.b16 %v157
    %v516 = vunpack.c.h.b16 %v157
    %v517 = vunpack.c.l.b16 %v158
    %v518 = vunpack.c.h.b16 %v158
    %v519 = vunpack.c.l.b16 %v159
    %v520 = vunpack.c.h.b16 %v159
    %v521 = vunpack.c.l.b16 %v160
    %v522 = vunpack.c.h.b16 %v160
    %v523 = vunpack.c.l.b16 %v161
    %v524 = vunpack.c.h.b16 %v161
    %v525 = vunpack.c.l.b16 %v162
    %v526 = vunpack.c.h.b16 %v162
    %v527 = vunpack.c.l.b16 %v163
    %v528 = vunpack.c.h.b16 %v163
    %v529 = vunpack.c.l.b16 %v164
    %v530 = vunpack.c.h.b16 %v164
    %v531 = vunpack.c.l.b16 %v165
    %v532 = vunpack.c.h.b16 %v165
    %v533 = vunpack.c.l.b16 %v166
    %v534 = vunpack.c.h.b16 %v166
    %v535 = vunpack.c.l.b16 %v167
    %v536 = vunpack.c.h.b16 %v167
    %v537 = vunpack.c.l.b16 %v168
    %v538 = vunpack.c.h.b16 %v168
    %v539 = vunpack.c.l.b16 %v169
    %v540 = vunpack.c.h.b16 %v169
    %v541 = vunpack.c.l.b16 %v170
    %v542 = vunpack.c.h.b16 %v170
    %v543 = vunpack.c.l.b16 %v171
    %v544 = vunpack.c.h.b16 %v171
    %v545 = vpack.c.b16 %v323, %v321
    %v546 = vpack.c.b16 %v324, %v322
    %v547 = vpack.c.b16 %v327, %v325
    %v548 = vpack.c.b16 %v328, %v326
    %v549 = vpack.c.b16 %v331, %v329
    %v550 = vpack.c.b16 %v332, %v330
    %v551 = vpack.c.b16 %v335, %v333
    %v552 = vpack.c.b16 %v336, %v334
    %v553 = vpack.c.b16 %v339, %v337
    %v554 = vpack.c.b16 %v340, %v338
    %v555 = vpack.c.b16 %v343, %v341
    %v556 = vpack.c.b16 %v344, %v342
    %v557 = vpack.c.b16 %v347, %v345
    %v558 = vpack.c.b16 %v348, %v346
    %v559 = vpack.c.b16 %v351, %v349
    %v560 = vpack.c.b16 %v352, %v350
    %v561 = vpack.c.b16 %v355, %v353
    %v562 = vpack.c.b16 %v356, %v354
    %v563 = vpack.c.b16 %v359, %v357
    %v564 = vpack.c.b16 %v360, %v358
    %v565 = vpack.c.b16 %v363, %v361
    %v566 = vpack.c.b16 %v364, %v362
    %v567 = vpack.c.b16 %v367, %v365
    %v568 = vpack.c.b16 %v368, %v366
    %v569 = vpack.c.b16 %v371, %v369
    %v570 = vpack.c.b16 %v372, %v370
    %v571 = vpack.c.b16 %v375, %v373
    %v572 = vpack.c.b16 %v376, %v374
    %v573 = vpack.c.b16 %v379, %v377
    %v574 = vpack.c.b16 %v380, %v378
    %v575 = vpack.c.b16 %v383, %v381
    %v576 = vpack.c.b16 %v384, %v382
    %v577 = vpack.c.b16 %v387, %v385
    %v578 = vpack.c.b16 %v388, %v386
    %v579 = vpack.c.b16 %v391, %v389
    %v580 = vpack.c.b16 %v392, %v390
    %v581 = vpack.c.b16 %v395, %v393
    %v582 = vpack.c.b16 %v396, %v394
    %v583 = vpack.c.b16 %v399, %v397
    %v584 = vpack.c.b16 %v400, %v398
    %v585 = vpack.c.b16 %v403, %v401
    %v586 = vpack.c.b16 %v404, %v402
    %v587 = vpack.c.b16 %v407, %v405
    %v588 = vpack.c.b16 %v408, %v406
    %v589 = vpack.c.b16 %v411, %v409
    %v590 = vpack.c.b16 %v412, %v410
    %v591 = vpack.c.b16 %v415, %v413
    %v592 = vpack.c.b16 %v416, %v414
    %v593 = vpack.c.b16 %v419, %v417
    %v594 = vpack.c.b16 %v420, %v418
    %v595 = vpack.c.b16 %v423, %v421
    %v596 = vpack.c.b16 %v424, %v422
    %v597 = vpack.c.b16 %v427, %v425
    %v598 = vpack.c.b16 %v428, %v426
    %v599 = vpack.c.b16 %v431, %v429
    %v600 = vpack.c.b16 %v432, %v430
    %v601 = vpack.c.b16 %v435, %v433
    %v602 = vpack.c.b16 %v436, %v434
    %v603 = vpack.c.b16 %v439, %v437
    %v604 = vpack.c.b16 %v440, %v438
    %v605 = vpack.c.b16 %v443, %v441
    %v606 = vpack.c.b16 %v444, %v442
    %v607 = vpack.c.b16 %v447, %v445
    %v608 = vpack.c.b16 %v448, %v446
    %v609 = vpack.c.b16 %v451, %v449
    %v610 = vpack.c.b16 %v452, %v450
    %v611 = vpack.c.b16 %v455, %v453
    %v612 = vpack.c.b16 %v456, %v454
    %v613 = vpack.c.b16 %v459, %v457
    %v614 = vpack.c.b16 %v460, %v458
    %v615 = vpack.c.b16 %v463, %v461
    %v616 = vpack.c.b16 %v464, %v462
    %v617 = vpack.c.b16 %v467, %v465
    %v618 = vpack.c.b16 %v468, %v466
    %v619 = vpack.c.b16 %v471, %v469
    %v620 = vpack.c.b16 %v472, %v470
    %v621 = vpack.c.b16 %v475, %v473
    %v622 = vpack.c.b16 %v476, %v474
    %v623 = vpack.c.b16 %v479, %v477
    %v624 = vpack.c.b16 %v480, %v478
    %v625 = vpack.c.b16 %v483, %v481
    %v626 = vpack.c.b16 %v484, %v482
    %v627 = vpack.c.b16 %v487, %v485
    %v628 = vpack.c.b16 %v488, %v486
    %v629 = vpack.c.b16 %v491, %v489
    %v630 = vpack.c.b16 %v492, %v490
    %v631 = vpack.c.b16 %v495, %v493
    %v632 = vpack.c.b16 %v496, %v494
    %v633 = vpack.c.b16 %v499, %v497
    %v634 = vpack.c.b16 %v500, %v498
    %v635 = vpack.c.b16 %v503, %v501
    %v636 = vpack.c.b16 %v504, %v502
    %v637 = vpack.c.b16 %v507, %v505
    %v638 = vpack.c.b16 %v508, %v506
    %v639 = vpack.c.b16 %v511, %v509
    %v640 = vpack.c.b16 %v512, %v510
    %v641 = vpack.c.b16 %v515, %v513
    %v642 = vpack.c.b16 %v516, %v514
    %v643 = vpack.c.b16 %v519, %v517
    %v644 = vpack.c.b16 %v520, %v518
    %v645 = vpack.c.b16 %v523, %v521
    %v646 = vpack.c.b16 %v524, %v522
    %v647 = vpack.c.b16 %v527, %v525
    %v648 = vpack.c.b16 %v528, %v526
    %v649 = vpack.c.b16 %v531, %v529
    %v650 = vpack.c.b16 %v532, %v530
    %v651 = vpack.c.b16 %v535, %v533
    %v652 = vpack.c.b16 %v536, %v534
    %v653 = vpack.c.b16 %v539, %v537
    %v654 = vpack.c.b16 %v540, %v538
    %v655 = vpack.c.b16 %v543, %v541
    %v656 = vpack.c.b16 %v544, %v542
    %769 = vmatprep.subr.bf16.mxu0 %v546
    %770 = vmatpush1.bf16.msra.mxu0 %v545
    %771 = vmatprep.subr.bf16.mxu0 %v548
    %772 = vmatpush1.bf16.msra.mxu0 %v547
    %773 = vmatprep.subr.bf16.mxu0 %v550
    %774 = vmatpush1.bf16.msra.mxu0 %v549
    %775 = vmatprep.subr.bf16.mxu0 %v552
    %776 = vmatpush1.bf16.msra.mxu0 %v551
    %777 = vmatprep.subr.bf16.mxu0 %v554
    %778 = vmatpush1.bf16.msra.mxu0 %v553
    %779 = vmatprep.subr.bf16.mxu0 %v556
    %780 = vmatpush1.bf16.msra.mxu0 %v555
    %781 = vmatprep.subr.bf16.mxu0 %v558
    %782 = vmatpush1.bf16.msra.mxu0 %v557
    %783 = vmatprep.subr.bf16.mxu0 %v560
    %784 = vmatpush1.bf16.msra.mxu0 %v559
    %785 = vmatprep.subr.bf16.mxu0 %v562
    %786 = vmatpush1.bf16.msra.mxu0 %v561
    %787 = vmatprep.subr.bf16.mxu0 %v564
    %788 = vmatpush1.bf16.msra.mxu0 %v563
    %789 = vmatprep.subr.bf16.mxu0 %v566
    %790 = vmatpush1.bf16.msra.mxu0 %v565
    %791 = vmatprep.subr.bf16.mxu0 %v568
    %792 = vmatpush1.bf16.msra.mxu0 %v567
    %793 = vmatprep.subr.bf16.mxu0 %v570
    %794 = vmatpush1.bf16.msra.mxu0 %v569
    %795 = vmatprep.subr.bf16.mxu0 %v572
    %796 = vmatpush1.bf16.msra.mxu0 %v571
    %797 = vmatprep.subr.bf16.mxu0 %v574
    %798 = vmatpush1.bf16.msra.mxu0 %v573
    %799 = vmatprep.subr.bf16.mxu0 %v576
    %800 = vmatpush1.bf16.msra.mxu0 %v575
    %801 = vmatprep.mubr.bf16.mxu0 %v196
    %802 = vmatmul.mubr.bf16.gmra.mrb[0].mxu0 %v195
    %v803 = vpop.f32.mrb[0].mxu0
    %v804 = vadd.f32 %v177, %v803
    %v805 = vpop.f32.mrb[0].mxu0
    %v806 = vadd.f32 %v181, %v805
    %v807 = vpop.f32.mrb[0].mxu0
    %v808 = vpop.f32.mrb[0].mxu0
    %809 = vdwg.mxu0
    %810 = vmatprep.subr.bf16.mxu0 %v578
    %811 = vmatpush1.bf16.msra.mxu0 %v577
    %812 = vmatprep.subr.bf16.mxu0 %v580
    %813 = vmatpush1.bf16.msra.mxu0 %v579
    %814 = vmatprep.subr.bf16.mxu0 %v582
    %815 = vmatpush1.bf16.msra.mxu0 %v581
    %816 = vmatprep.subr.bf16.mxu0 %v584
    %817 = vmatpush1.bf16.msra.mxu0 %v583
    %818 = vmatprep.subr.bf16.mxu0 %v586
    %819 = vmatpush1.bf16.msra.mxu0 %v585
    %820 = vmatprep.subr.bf16.mxu0 %v588
    %821 = vmatpush1.bf16.msra.mxu0 %v587
    %822 = vmatprep.subr.bf16.mxu0 %v590
    %823 = vmatpush1.bf16.msra.mxu0 %v589
    %824 = vmatprep.subr.bf16.mxu0 %v592
    %825 = vmatpush1.bf16.msra.mxu0 %v591
    %826 = vmatprep.subr.bf16.mxu0 %v594
    %827 = vmatpush1.bf16.msra.mxu0 %v593
    %828 = vmatprep.subr.bf16.mxu0 %v596
    %829 = vmatpush1.bf16.msra.mxu0 %v595
    %830 = vmatprep.subr.bf16.mxu0 %v598
    %831 = vmatpush1.bf16.msra.mxu0 %v597
    %832 = vmatprep.subr.bf16.mxu0 %v600
    %833 = vmatpush1.bf16.msra.mxu0 %v599
    %834 = vmatprep.subr.bf16.mxu0 %v602
    %835 = vmatpush1.bf16.msra.mxu0 %v601
    %836 = vmatprep.subr.bf16.mxu0 %v604
    %837 = vmatpush1.bf16.msra.mxu0 %v603
    %838 = vmatprep.subr.bf16.mxu0 %v606
    %839 = vmatpush1.bf16.msra.mxu0 %v605
    %840 = vmatprep.subr.bf16.mxu0 %v608
    %841 = vmatpush1.bf16.msra.mxu0 %v607
    %842 = vmatprep.mubr.bf16.mxu0 %v198
    %843 = vmatmul.mubr.bf16.gmra.mrb[0].mxu0 %v197
    %v844 = vpop.f32.mrb[0].mxu0
    %v845 = vadd.f32 %v804, %v844
    %v846 = vpop.f32.mrb[0].mxu0
    %v847 = vadd.f32 %v806, %v846
    %v848 = vpop.f32.mrb[0].mxu0
    %v849 = vpop.f32.mrb[0].mxu0
    %850 = vdwg.mxu0
    %851 = vmatprep.subr.bf16.mxu0 %v610
    %852 = vmatpush1.bf16.msra.mxu0 %v609
    %853 = vmatprep.subr.bf16.mxu0 %v612
    %854 = vmatpush1.bf16.msra.mxu0 %v611
    %855 = vmatprep.subr.bf16.mxu0 %v614
    %856 = vmatpush1.bf16.msra.mxu0 %v613
    %857 = vmatprep.subr.bf16.mxu0 %v616
    %858 = vmatpush1.bf16.msra.mxu0 %v615
    %859 = vmatprep.subr.bf16.mxu0 %v618
    %860 = vmatpush1.bf16.msra.mxu0 %v617
    %861 = vmatprep.subr.bf16.mxu0 %v620
    %862 = vmatpush1.bf16.msra.mxu0 %v619
    %863 = vmatprep.subr.bf16.mxu0 %v622
    %864 = vmatpush1.bf16.msra.mxu0 %v621
    %865 = vmatprep.subr.bf16.mxu0 %v624
    %866 = vmatpush1.bf16.msra.mxu0 %v623
    %867 = vmatprep.subr.bf16.mxu0 %v626
    %868 = vmatpush1.bf16.msra.mxu0 %v625
    %869 = vmatprep.subr.bf16.mxu0 %v628
    %870 = vmatpush1.bf16.msra.mxu0 %v627
    %871 = vmatprep.subr.bf16.mxu0 %v630
    %872 = vmatpush1.bf16.msra.mxu0 %v629
    %873 = vmatprep.subr.bf16.mxu0 %v632
    %874 = vmatpush1.bf16.msra.mxu0 %v631
    %875 = vmatprep.subr.bf16.mxu0 %v634
    %876 = vmatpush1.bf16.msra.mxu0 %v633
    %877 = vmatprep.subr.bf16.mxu0 %v636
    %878 = vmatpush1.bf16.msra.mxu0 %v635
    %879 = vmatprep.subr.bf16.mxu0 %v638
    %880 = vmatpush1.bf16.msra.mxu0 %v637
    %881 = vmatprep.subr.bf16.mxu0 %v640
    %882 = vmatpush1.bf16.msra.mxu0 %v639
    %883 = vmatprep.mubr.bf16.mxu0 %v200
    %884 = vmatmul.mubr.bf16.gmra.mrb[0].mxu0 %v199
    %v885 = vpop.f32.mrb[0].mxu0
    %v886 = vadd.f32 %v845, %v885
    %v887 = vpop.f32.mrb[0].mxu0
    %v888 = vadd.f32 %v847, %v887
    %v889 = vpop.f32.mrb[0].mxu0
    %v890 = vpop.f32.mrb[0].mxu0
    %891 = vdwg.mxu0
    %892 = vmatprep.subr.bf16.mxu0 %v642
    %893 = vmatpush1.bf16.msra.mxu0 %v641
    %894 = vmatprep.subr.bf16.mxu0 %v644
    %895 = vmatpush1.bf16.msra.mxu0 %v643
    %896 = vmatprep.subr.bf16.mxu0 %v646
    %897 = vmatpush1.bf16.msra.mxu0 %v645
    %898 = vmatprep.subr.bf16.mxu0 %v648
    %899 = vmatpush1.bf16.msra.mxu0 %v647
    %900 = vmatprep.subr.bf16.mxu0 %v650
    %901 = vmatpush1.bf16.msra.mxu0 %v649
    %902 = vmatprep.subr.bf16.mxu0 %v652
    %903 = vmatpush1.bf16.msra.mxu0 %v651
    %904 = vmatprep.subr.bf16.mxu0 %v654
    %905 = vmatpush1.bf16.msra.mxu0 %v653
    %906 = vmatprep.subr.bf16.mxu0 %v656
    %907 = vmatpush1.bf16.msra.mxu0 %v655
    %908 = vmatprep.subr.bf16.mxu0 0
    %909 = vmatpush1.bf16.msra.mxu0 0
    %910 = vmatprep.subr.bf16.mxu0 0
    %911 = vmatpush1.bf16.msra.mxu0 0
    %912 = vmatprep.subr.bf16.mxu0 0
    %913 = vmatpush1.bf16.msra.mxu0 0
    %914 = vmatprep.subr.bf16.mxu0 0
    %915 = vmatpush1.bf16.msra.mxu0 0
    %916 = vmatprep.subr.bf16.mxu0 0
    %917 = vmatpush1.bf16.msra.mxu0 0
    %918 = vmatprep.subr.bf16.mxu0 0
    %919 = vmatpush1.bf16.msra.mxu0 0
    %920 = vmatprep.subr.bf16.mxu0 0
    %921 = vmatpush1.bf16.msra.mxu0 0
    %922 = vmatprep.subr.bf16.mxu0 0
    %923 = vmatpush1.bf16.msra.mxu0 0
    %924 = vmatprep.mubr.bf16.mxu0 0
    %925 = vmatmul.mubr.bf16.gmra.mrb[0].mxu0 %v201
    %v926 = vpop.f32.mrb[0].mxu0
    %v927 = vadd.f32 %v886, %v926
    %v928 = vpop.f32.mrb[0].mxu0
    %v929 = vadd.f32 %v888, %v928
    %v930 = vpop.f32.mrb[0].mxu0
    %v931 = vpop.f32.mrb[0].mxu0
    %932 = vdwg.mxu0
    %v933 = vmax.f32 %v927, 0.0
    %v934 = vmax.f32 %v929, 0.0
    %v935 = vpack.c.bf16 %v933, %v933
    %v936 = vpack.c.bf16 %v934, %v934
    %v937 = vld [vmem:[%s3] sm:$0xf]
    %v938 = vld [vmem:[%s3 + $0x4] sm:$0xf]
    %v939 = vld [vmem:[%s3 + $0x8] sm:$0xf]
    %v940 = vld [vmem:[%s3 + $0xc] sm:$0xf]
    %v941 = vld [vmem:[%s3 + $0x10] sm:$0xf]
    %v942 = vld [vmem:[%s3 + $0x14] sm:$0xf]
    %v943 = vld [vmem:[%s3 + $0x18] sm:$0xf]
    %v944 = vld [vmem:[%s3 + $0x1c] sm:$0xf]
    %v945 = vld [vmem:[%s3 + $0x20] sm:$0xf]
    %v946 = vld [vmem:[%s3 + $0x24] sm:$0xf]
    %v947 = vld [vmem:[%s3 + $0x28] sm:$0xf]
    %v948 = vld [vmem:[%s3 + $0x2c] sm:$0xf]
    %v949 = vld [vmem:[%s3 + $0x30] sm:$0xf]
    %v950 = vld [vmem:[%s3 + $0x34] sm:$0xf]
    %v951 = vld [vmem:[%s3 + $0x38] sm:$0xf]
    %v952 = vld [vmem:[%s3 + $0x3c] sm:$0xf]
    %v953 = vld [vmem:[%s3 + $0x40] sm:$0xf]
    %v954 = vld [vmem:[%s3 + $0x44] sm:$0xf]
    %v955 = vld [vmem:[%s3 + $0x48] sm:$0xf]
    %v956 = vld [vmem:[%s3 + $0x4c] sm:$0xf]
    %v957 = vld [vmem:[%s3 + $0x50] sm:$0xf]
    %v958 = vld [vmem:[%s3 + $0x54] sm:$0xf]
    %v959 = vld [vmem:[%s3 + $0x58] sm:$0xf]
    %v960 = vld [vmem:[%s3 + $0x5c] sm:$0xf]
    %v961 = vld [vmem:[%s3 + $0x60] sm:$0xf]
    %v962 = vld [vmem:[%s3 + $0x64] sm:$0xf]
    %v963 = vld [vmem:[%s3 + $0x68] sm:$0xf]
    %v964 = vld [vmem:[%s3 + $0x6c] sm:$0xf]
    %v965 = vld [vmem:[%s3 + $0x70] sm:$0xf]
    %v966 = vld [vmem:[%s3 + $0x74] sm:$0xf]
    %v967 = vld [vmem:[%s3 + $0x78] sm:$0xf]
    %v968 = vld [vmem:[%s3 + $0x7c] sm:$0xf]
    %v969 = vld [vmem:[%s4] sm:$0x1]
    %v971 = vlaneseq
    %v972 = vshrl.u32 %v971, 7
    %v973 = vsub.s32 0, %v972
    %v974 = vrot.slane %v969, %v973
    %v1008 = vunpack.c.l.b16 %v937
    %v1009 = vunpack.c.l.b16 %v938
    %v1010 = vunpack.c.l.b16 %v939
    %v1011 = vunpack.c.l.b16 %v940
    %v1012 = vunpack.c.l.b16 %v941
    %v1013 = vunpack.c.l.b16 %v942
    %v1014 = vunpack.c.l.b16 %v943
    %v1015 = vunpack.c.l.b16 %v944
    %v1016 = vunpack.c.l.b16 %v945
    %v1017 = vunpack.c.l.b16 %v946
    %v1018 = vunpack.c.l.b16 %v947
    %v1019 = vunpack.c.l.b16 %v948
    %v1020 = vunpack.c.l.b16 %v949
    %v1021 = vunpack.c.l.b16 %v950
    %v1022 = vunpack.c.l.b16 %v951
    %v1023 = vunpack.c.l.b16 %v952
    %v1024 = vunpack.c.l.b16 %v953
    %v1025 = vunpack.c.l.b16 %v954
    %v1026 = vunpack.c.l.b16 %v955
    %v1027 = vunpack.c.l.b16 %v956
    %v1028 = vunpack.c.l.b16 %v957
    %v1029 = vunpack.c.l.b16 %v958
    %v1030 = vunpack.c.l.b16 %v959
    %v1031 = vunpack.c.l.b16 %v960
    %v1032 = vunpack.c.l.b16 %v961
    %v1033 = vunpack.c.l.b16 %v962
    %v1034 = vunpack.c.l.b16 %v963
    %v1035 = vunpack.c.l.b16 %v964
    %v1036 = vunpack.c.l.b16 %v965
    %v1037 = vunpack.c.l.b16 %v966
    %v1038 = vunpack.c.l.b16 %v967
    %v1039 = vunpack.c.l.b16 %v968
    %v1040 = vpack.c.b16 %v1009, %v1008
    %v1041 = vpack.c.b16 %v1011, %v1010
    %v1042 = vpack.c.b16 %v1013, %v1012
    %v1043 = vpack.c.b16 %v1015, %v1014
    %v1044 = vpack.c.b16 %v1017, %v1016
    %v1045 = vpack.c.b16 %v1019, %v1018
    %v1046 = vpack.c.b16 %v1021, %v1020
    %v1047 = vpack.c.b16 %v1023, %v1022
    %v1048 = vpack.c.b16 %v1025, %v1024
    %v1049 = vpack.c.b16 %v1027, %v1026
    %v1050 = vpack.c.b16 %v1029, %v1028
    %v1051 = vpack.c.b16 %v1031, %v1030
    %v1052 = vpack.c.b16 %v1033, %v1032
    %v1053 = vpack.c.b16 %v1035, %v1034
    %v1054 = vpack.c.b16 %v1037, %v1036
    %v1055 = vpack.c.b16 %v1039, %v1038
    %1072 = vmatprep.subr.bf16.mxu0 0
    %1073 = vmatpush1.bf16.msra.mxu0 %v1040
    %1074 = vmatprep.subr.bf16.mxu0 0
    %1075 = vmatpush1.bf16.msra.mxu0 %v1041
    %1076 = vmatprep.subr.bf16.mxu0 0
    %1077 = vmatpush1.bf16.msra.mxu0 %v1042
    %1078 = vmatprep.subr.bf16.mxu0 0
    %1079 = vmatpush1.bf16.msra.mxu0 %v1043
    %1080 = vmatprep.subr.bf16.mxu0 0
    %1081 = vmatpush1.bf16.msra.mxu0 %v1044
    %1082 = vmatprep.subr.bf16.mxu0 0
    %1083 = vmatpush1.bf16.msra.mxu0 %v1045
    %1084 = vmatprep.subr.bf16.mxu0 0
    %1085 = vmatpush1.bf16.msra.mxu0 %v1046
    %1086 = vmatprep.subr.bf16.mxu0 0
    %1087 = vmatpush1.bf16.msra.mxu0 %v1047
    %1088 = vmatprep.subr.bf16.mxu0 0
    %1089 = vmatpush1.bf16.msra.mxu0 %v1048
    %1090 = vmatprep.subr.bf16.mxu0 0
    %1091 = vmatpush1.bf16.msra.mxu0 %v1049
    %1092 = vmatprep.subr.bf16.mxu0 0
    %1093 = vmatpush1.bf16.msra.mxu0 %v1050
    %1094 = vmatprep.subr.bf16.mxu0 0
    %1095 = vmatpush1.bf16.msra.mxu0 %v1051
    %1096 = vmatprep.subr.bf16.mxu0 0
    %1097 = vmatpush1.bf16.msra.mxu0 %v1052
    %1098 = vmatprep.subr.bf16.mxu0 0
    %1099 = vmatpush1.bf16.msra.mxu0 %v1053
    %1100 = vmatprep.subr.bf16.mxu0 0
    %1101 = vmatpush1.bf16.msra.mxu0 %v1054
    %1102 = vmatprep.subr.bf16.mxu0 0
    %1103 = vmatpush1.bf16.msra.mxu0 %v1055
    %1104 = vmatprep.mubr.bf16.mxu0 %v936
    %1105 = vmatmul.mubr.bf16.gmra.mrb[0].mxu0 %v935
    %v1106 = vpop.f32.mrb[0].mxu0
    %v1107 = vadd.f32 %v974, %v1106
    %v1108 = vpop.f32.mrb[0].mxu0
    %v1109 = vpop.f32.mrb[0].mxu0
    %v1110 = vpop.f32.mrb[0].mxu0
    %1111 = vdwg.mxu0
    %v1112 = vmax.f32 %v1107, 0.0
    %v1113 = vpack.c.bf16 %v1112, %v1112
    %v1114 = vld [vmem:[#allocation5] sm:$0xf]
    %v1115 = vld [vmem:[#allocation5 + $0x4] sm:$0xf]
    %v1116 = vld [vmem:[#allocation5 + $0x8] sm:$0xf]
    %v1117 = vld [vmem:[#allocation5 + $0xc] sm:$0xf]
    %v1118 = vld [vmem:[#allocation5 + $0x10] sm:$0xf]
    %v1119 = vld [vmem:[#allocation5 + $0x14] sm:$0xf]
    %v1120 = vld [vmem:[#allocation5 + $0x18] sm:$0xf]
    %v1121 = vld [vmem:[#allocation5 + $0x1c] sm:$0xf]
    %v1122 = vld [vmem:[#allocation5 + $0x20] sm:$0xf]
    %v1123 = vld [vmem:[#allocation5 + $0x24] sm:$0xf]
    %v1124 = vld [vmem:[#allocation5 + $0x28] sm:$0xf]
    %v1125 = vld [vmem:[#allocation5 + $0x2c] sm:$0xf]
    %v1126 = vld [vmem:[#allocation5 + $0x30] sm:$0xf]
    %v1127 = vld [vmem:[#allocation5 + $0x34] sm:$0xf]
    %v1128 = vld [vmem:[#allocation5 + $0x38] sm:$0xf]
    %v1129 = vld [vmem:[#allocation5 + $0x3c] sm:$0xf]
    %v1130 = vld [vmem:[%s6] sm:$0x1]
    %v1132 = vlaneseq
    %v1133 = vshrl.u32 %v1132, 7
    %v1134 = vsub.s32 0, %v1133
    %v1135 = vrot.slane %v1130, %v1134
    %v1153 = vunpack.c.l.b16 %v1114
    %v1154 = vunpack.c.l.b16 %v1115
    %v1155 = vunpack.c.l.b16 %v1116
    %v1156 = vunpack.c.l.b16 %v1117
    %v1157 = vunpack.c.l.b16 %v1118
    %v1158 = vunpack.c.l.b16 %v1119
    %v1159 = vunpack.c.l.b16 %v1120
    %v1160 = vunpack.c.l.b16 %v1121
    %v1161 = vunpack.c.l.b16 %v1122
    %v1162 = vunpack.c.l.b16 %v1123
    %v1163 = vunpack.c.l.b16 %v1124
    %v1164 = vunpack.c.l.b16 %v1125
    %v1165 = vunpack.c.l.b16 %v1126
    %v1166 = vunpack.c.l.b16 %v1127
    %v1167 = vunpack.c.l.b16 %v1128
    %v1168 = vunpack.c.l.b16 %v1129
    %v1169 = vpack.c.b16 %v1154, %v1153
    %v1170 = vpack.c.b16 %v1156, %v1155
    %v1171 = vpack.c.b16 %v1158, %v1157
    %v1172 = vpack.c.b16 %v1160, %v1159
    %v1173 = vpack.c.b16 %v1162, %v1161
    %v1174 = vpack.c.b16 %v1164, %v1163
    %v1175 = vpack.c.b16 %v1166, %v1165
    %v1176 = vpack.c.b16 %v1168, %v1167
    %1185 = vmatprep.subr.bf16.mxu0 0
    %1186 = vmatpush1.bf16.msra.mxu0 %v1169
    %1187 = vmatprep.subr.bf16.mxu0 0
    %1188 = vmatpush1.bf16.msra.mxu0 %v1170
    %1189 = vmatprep.subr.bf16.mxu0 0
    %1190 = vmatpush1.bf16.msra.mxu0 %v1171
    %1191 = vmatprep.subr.bf16.mxu0 0
    %1192 = vmatpush1.bf16.msra.mxu0 %v1172
    %1193 = vmatprep.subr.bf16.mxu0 0
    %1194 = vmatpush1.bf16.msra.mxu0 %v1173
    %1195 = vmatprep.subr.bf16.mxu0 0
    %1196 = vmatpush1.bf16.msra.mxu0 %v1174
    %1197 = vmatprep.subr.bf16.mxu0 0
    %1198 = vmatpush1.bf16.msra.mxu0 %v1175
    %1199 = vmatprep.subr.bf16.mxu0 0
    %1200 = vmatpush1.bf16.msra.mxu0 %v1176
    %1201 = vmatprep.subr.bf16.mxu0 0
    %1202 = vmatpush1.bf16.msra.mxu0 0
    %1203 = vmatprep.subr.bf16.mxu0 0
    %1204 = vmatpush1.bf16.msra.mxu0 0
    %1205 = vmatprep.subr.bf16.mxu0 0
    %1206 = vmatpush1.bf16.msra.mxu0 0
    %1207 = vmatprep.subr.bf16.mxu0 0
    %1208 = vmatpush1.bf16.msra.mxu0 0
    %1209 = vmatprep.subr.bf16.mxu0 0
    %1210 = vmatpush1.bf16.msra.mxu0 0
    %1211 = vmatprep.subr.bf16.mxu0 0
    %1212 = vmatpush1.bf16.msra.mxu0 0
    %1213 = vmatprep.subr.bf16.mxu0 0
    %1214 = vmatpush1.bf16.msra.mxu0 0
    %1215 = vmatprep.subr.bf16.mxu0 0
    %1216 = vmatpush1.bf16.msra.mxu0 0
    %1217 = vmatprep.mubr.bf16.mxu0 0
    %1218 = vmatmul.mubr.bf16.gmra.mrb[0].mxu0 %v1113
    %v1219 = vpop.f32.mrb[0].mxu0
    %v1220 = vadd.f32 %v1135, %v1219
    %v1221 = vpop.f32.mrb[0].mxu0
    %v1222 = vpop.f32.mrb[0].mxu0
    %v1223 = vpop.f32.mrb[0].mxu0
    %1224 = vdwg.mxu0
    %1225 = vst [vmem:[#allocation7] sm:$0xff] %v1220
    // Predicated region
    $region38: #{mnist_model_forward.1} parent=1 // pred_check
      _
    $region39: #{mnist_model_forward.1} parent=1 // pred_check_branch
      %1227 = sbr.rel (0) target = $region41
    $region40: #{mnist_model_forward.1} parent=1 // pred_region
      %s1229 = ssub.s32 128, 128
      %1230 = vsyncadd [#allocation4], %s1229
      %s1232 = sshll.u32 [#allocation7], 4
      %s1233 = int_to_ptr.vmem [resolvable:$true] %s1232
      %1235 = dma.vmem_to_hbm [thread:$0]  %s1233, 128, %s7, [#allocation4]
    $region41: #{mnist_model_forward.1} parent=1 // pred_fallthru
      _
    // Predicated region
    $region42: #{mnist_model_forward.1} parent=1 // pred_check
      _
    $region43: #{mnist_model_forward.1} parent=1 // pred_check_branch
      %1237 = sbr.rel (0) target = $region45
    $region44: #{mnist_model_forward.1} parent=1 // pred_region
      %1238 = dma.done [#allocation4], 128
    $region45: #{mnist_model_forward.1} parent=1 // pred_fallthru
      _
    %1239 = vsyncpa [#allocation3], 1
    %1240 = vsyncpa [#allocation6], 1
    %1241 = vsyncpa [#allocation4], 1

</llo_original>
